<compile_context>
chip_gen: v5e
topology: v5e:2x2
jax: 0.10.0
libtpu: 0.0.40
codegen_flags: <defaults>
</compile_context>

<pallas_src>
import functools

import jax
import jax.numpy as jnp
from jax.experimental import pallas as pl
from jax.experimental.pallas import tpu as pltpu


_VMEM_LIMIT = 32 * 1024 * 1024   # explicit scoped-VMEM budget, safe on v5e/v6e/v7x


def _round_up(x, m):
    return ((x + m - 1) // m) * m


# ----------------------------------------------------------------------------
# Pallas kernel: single-K-step matmul + fused BN-shift / residual / ReLU epilogue
# ----------------------------------------------------------------------------

def _mm_epilogue_kernel(a_ref, b_ref, shift_ref, *rest, relu, has_res):
    """out = act( A @ W + shift (+ residual) ); W already carries the BN scale."""
    if has_res:
        res_ref, o_ref = rest
    else:
        (o_ref,) = rest

    out = jnp.dot(a_ref[...], b_ref[...], preferred_element_type=jnp.float32)
    out = out + shift_ref[...]                       # (1, tn) broadcast over rows
    if has_res:
        out = out + res_ref[...].astype(jnp.float32)
    if relu:
        out = jnp.maximum(out, 0.0)
    o_ref[...] = out.astype(o_ref.dtype)


def matmul_bias_act(a, prep, residual=None, relu=True, out_dtype=jnp.bfloat16):
    """Pallas call: out[Mp, Np] = act( a @ W + shift (+ residual) ).

    `prep` holds the pre-padded, BN-scale-folded bf16 weights, the f32 shift row and
    static tiling metadata (built once in prepare_resnet18_params).
    Returns (out, Mp) so callers can slice off the M padding only when present.
    """
    M, K = a.shape
    assert K == prep["K"], (K, prep["K"])
    Kp, Np, tn = prep["Kp"], prep["Np"], prep["tn"]

    tm = min(256, _round_up(M, 16))                  # bf16 wants multiples of 16 rows
    Mp = _round_up(M, tm)
    # v7x has 2 TensorCores: make sure there are >=2 parallel tiles when M allows.
    if (Mp // tm) * (Np // tn) < 2 and M >= 32 and M % 32 == 0:
        tm = M // 2
        Mp = M

    a = a.astype(jnp.bfloat16)
    if (Mp, Kp) != (M, K):
        a = jnp.pad(a, ((0, Mp - M), (0, Kp - K)))   # only stem (K) / tiny-M layers

    inputs = [a, prep["w"], prep["shift"]]
    in_specs = [
        pl.BlockSpec((tm, Kp), lambda i, j: (i, 0)),
        pl.BlockSpec((Kp, tn), lambda i, j: (0, j)),
        pl.BlockSpec((1, tn), lambda i, j: (0, j)),
    ]
    has_res = residual is not None
    if has_res:
        assert residual.shape[1] == Np, (residual.shape, Np)
        r = residual.astype(jnp.bfloat16)
        if Mp != residual.shape[0]:
            r = jnp.pad(r, ((0, Mp - residual.shape[0]), (0, 0)))
        inputs.append(r)
        in_specs.append(pl.BlockSpec((tm, tn), lambda i, j: (i, j)))

    kernel = functools.partial(_mm_epilogue_kernel, relu=relu, has_res=has_res)

    out = pl.pallas_call(
        kernel,
        out_shape=jax.ShapeDtypeStruct((Mp, Np), out_dtype),
        grid_spec=pltpu.PrefetchScalarGridSpec(
            num_scalar_prefetch=0,
            grid=(Mp // tm, Np // tn),
            in_specs=in_specs,
            out_specs=pl.BlockSpec((tm, tn), lambda i, j: (i, j)),
        ),
        compiler_params=pltpu.CompilerParams(
            dimension_semantics=("parallel", "parallel"),
            vmem_limit_bytes=_VMEM_LIMIT),
    )(*inputs)
    return out, Mp


# ----------------------------------------------------------------------------
# Conv-as-matmul glue (patch formation in XLA), pooling glue
# ----------------------------------------------------------------------------

def _im2col(x, kh, kw, stride, pad):
    """x: NHWC -> patches (B*Ho*Wo, kh*kw*C), tap ordering (i, j, c)."""
    B, H, W, C = x.shape
    Ho = (H + 2 * pad - kh) // stride + 1
    Wo = (W + 2 * pad - kw) // stride + 1
    if pad:
        x = jnp.pad(x, ((0, 0), (pad, pad), (pad, pad), (0, 0)))
    cols = []
    for i in range(kh):
        for j in range(kw):
            cols.append(x[:, i:i + stride * Ho:stride, j:j + stride * Wo:stride, :])
    patches = cols[0] if len(cols) == 1 else jnp.concatenate(cols, axis=-1)
    return patches.reshape(B * Ho * Wo, kh * kw * C), Ho, Wo


def conv_bn(x, prep, stride, pad, relu, residual=None):
    """Conv2d(bias=False)+BN(eval, folded) [+residual] [+ReLU]; NHWC, padded channels."""
    B = x.shape[0]
    patches, Ho, Wo = _im2col(x, prep["kh"], prep["kw"], stride, pad)
    res_flat = None
    if residual is not None:
        res_flat = residual.reshape(B * Ho * Wo, residual.shape[-1])
    out, Mp = matmul_bias_act(patches, prep, residual=res_flat, relu=relu)
    M = B * Ho * Wo
    if Mp != M:
        out = out[:M]
    return out.reshape(B, Ho, Wo, prep["Np"])


def maxpool_3x3_s2_p1(x):
    """MaxPool2d(k=3, s=2, p=1), NHWC.  Plain XLA max-chain over shifted views (fuses;
    zero padding is exact because the input is post-ReLU >= 0)."""
    B, H, W, C = x.shape
    k, s, p = 3, 2, 1
    Ho = (H + 2 * p - k) // s + 1
    Wo = (W + 2 * p - k) // s + 1
    xp = jnp.pad(x, ((0, 0), (p, p), (p, p), (0, 0)))
    out = None
    for i in range(k):
        for j in range(k):
            v = xp[:, i:i + s * Ho:s, j:j + s * Wo:s, :]
            out = v if out is None else jnp.maximum(out, v)
    return out


def basic_block(x, p):
    s = p["stride"]
    out = conv_bn(x, p["conv1"], stride=s, pad=1, relu=True)
    if p["down"] is not None:
        identity = conv_bn(x, p["down"], stride=s, pad=0, relu=False)
    else:
        identity = x
    out = conv_bn(out, p["conv2"], stride=1, pad=1, relu=True, residual=identity)
    return out


# ----------------------------------------------------------------------------
# Parameter init (deterministic, synthetic) + one-time weight prep
# ----------------------------------------------------------------------------

def _conv_init(key, cout, cin, k):
    fan_in = cin * k * k
    return jax.random.normal(key, (cout, cin, k, k), jnp.float32) * (2.0 / fan_in) ** 0.5


def _bn_init(key, c):
    k1, k2, k3, k4 = jax.random.split(key, 4)
    return dict(
        gamma=jax.random.uniform(k1, (c,), jnp.float32, 0.5, 1.5),
        beta=0.1 * jax.random.normal(k2, (c,), jnp.float32),
        mean=0.1 * jax.random.normal(k3, (c,), jnp.float32),
        var=jax.random.uniform(k4, (c,), jnp.float32, 0.5, 1.5),
    )


def init_resnet18_params(key, num_classes=10):
    keys = iter(jax.random.split(key, 128))
    params = {
        "conv1_w": _conv_init(next(keys), 64, 3, 7),
        "bn1": _bn_init(next(keys), 64),
    }
    layer_cfg = [(64, 2, 1), (128, 2, 2), (256, 2, 2), (512, 2, 2)]
    in_planes = 64
    layers = []
    for planes, nblocks, stride in layer_cfg:
        blocks = []
        for bi in range(nblocks):
            s = stride if bi == 0 else 1
            blk = {
                "stride": s,
                "conv1_w": _conv_init(next(keys), planes, in_planes, 3),
                "bn1": _bn_init(next(keys), planes),
                "conv2_w": _conv_init(next(keys), planes, planes, 3),
                "bn2": _bn_init(next(keys), planes),
                "down_w": None,
                "down_bn": None,
            }
            if s != 1 or in_planes != planes:
                blk["down_w"] = _conv_init(next(keys), planes, in_planes, 1)
                blk["down_bn"] = _bn_init(next(keys), planes)
            in_planes = planes
            blocks.append(blk)
        layers.append(blocks)
    params["layers"] = layers
    params["fc_w"] = 0.02 * jax.random.normal(next(keys), (num_classes, 512), jnp.float32)
    params["fc_b"] = 0.01 * jax.random.normal(next(keys), (num_classes,), jnp.float32)
    return params


def _prep_conv(w, bn, cin_carry, eps=1e-5):
    """Fold BN scale into the weight, pad Cin to the carried (128-padded) width,
    transpose/reshape to (Kp, Np) bf16.  Done ONCE at prep time."""
    Cout, Cin, kh, kw = w.shape
    scale = bn["gamma"] / jnp.sqrt(bn["var"] + eps)
    shift = bn["beta"] - bn["mean"] * scale
    w = w * scale[:, None, None, None]                      # fold scale into weights
    if cin_carry != Cin:
        w = jnp.pad(w, ((0, 0), (0, cin_carry - Cin), (0, 0), (0, 0)))
    K = kh * kw * cin_carry
    Kp = _round_up(K, 128)                                  # only the stem differs
    N = Cout
    tn = min(256, _round_up(N, 128))
    Np = _round_up(N, tn)
    wmat = jnp.transpose(w, (2, 3, 1, 0)).reshape(K, N)     # (i, j, cin) x cout
    wmat = jnp.pad(wmat, ((0, Kp - K), (0, Np - N))).astype(jnp.bfloat16)
    shift_row = jnp.zeros((1, Np), jnp.float32).at[0, :N].set(shift)   # padded cols = 0
    return {"w": wmat, "shift": shift_row, "K": K, "Kp": Kp, "N": N, "Np": Np,
            "tn": tn, "kh": kh, "kw": kw}


def _prep_fc(fc_w, fc_b):
    N, K = fc_w.shape
    Kp = _round_up(K, 128)
    tn = min(256, _round_up(N, 128))
    Np = _round_up(N, tn)
    wmat = jnp.pad(fc_w.T, ((0, Kp - K), (0, Np - N))).astype(jnp.bfloat16)
    shift_row = jnp.zeros((1, Np), jnp.float32).at[0, :N].set(fc_b)
    return {"w": wmat, "shift": shift_row, "K": K, "Kp": Kp, "N": N, "Np": Np,
            "tn": tn, "kh": 1, "kw": 1}


def prepare_resnet18_params(params):
    prep = {"conv1": _prep_conv(params["conv1_w"], params["bn1"], cin_carry=3)}
    carry = prep["conv1"]["Np"]          # channel width carried between layers (128-padded)
    layers = []
    for blocks in params["layers"]:
        pblocks = []
        for blk in blocks:
            pc1 = _prep_conv(blk["conv1_w"], blk["bn1"], cin_carry=carry)
            pc2 = _prep_conv(blk["conv2_w"], blk["bn2"], cin_carry=pc1["Np"])
            pdown = (_prep_conv(blk["down_w"], blk["down_bn"], cin_carry=carry)
                     if blk["down_w"] is not None else None)
            pblocks.append({"stride": blk["stride"],
                            "conv1": pc1, "conv2": pc2, "down": pdown})
            carry = pc2["Np"]
            layers.append
        layers.append(pblocks)
    prep["layers"] = layers
    prep["fc"] = _prep_fc(params["fc_w"], params["fc_b"])
    return prep


# ----------------------------------------------------------------------------
# Full forward pass
# ----------------------------------------------------------------------------

def resnet18_forward(prep, x_nchw):
    x = jnp.transpose(x_nchw, (0, 2, 3, 1)).astype(jnp.bfloat16)   # NCHW -> NHWC bf16
    # stem: conv7x7/s2 + BN + ReLU, then maxpool3x3/s2
    x = conv_bn(x, prep["conv1"], stride=2, pad=3, relu=True)
    x = maxpool_3x3_s2_p1(x)
    # residual stages (channel dim stays padded to a multiple of 128 throughout)
    for blocks in prep["layers"]:
        for blk in blocks:
            x = basic_block(x, blk)
    # AdaptiveAvgPool2d((1,1)) + flatten: tiny row-mean, left to XLA glue
    feat = jnp.mean(x.astype(jnp.float32), axis=(1, 2))            # (B, 512)
    # fc: y = feat @ W^T + b via the same Pallas matmul kernel
    out, _ = matmul_bias_act(feat, prep["fc"], relu=False, out_dtype=jnp.float32)
    B = x.shape[0]
    return out[:B, :prep["fc"]["N"]]


if __name__ == "__main__":
    key = jax.random.PRNGKey(0)
    pkey, xkey = jax.random.split(key)
    params = init_resnet18_params(pkey, num_classes=10)
    prep = prepare_resnet18_params(params)
    x = jax.random.normal(xkey, (2, 3, 32, 32), jnp.float32)        # NCHW input

    logits = resnet18_forward(prep, x)
    logits = jax.block_until_ready(logits)

    assert logits.shape == (2, 10), logits.shape
    assert bool(jnp.all(jnp.isfinite(logits)))
    print("KERNEL_OK")
</pallas_src>

<mosaic_0001>
module attributes {stable_mosaic.version = 11 : i64} {
  func.func @_mm_epilogue_kernel(%arg0: i32, %arg1: i32, %arg2: memref<256x256xbf16, #tpu.memory_space<vmem>>, %arg3: memref<256x128xbf16, #tpu.memory_space<vmem>>, %arg4: memref<1x128xf32, #tpu.memory_space<vmem>>, %arg5: memref<256x128xbf16, #tpu.memory_space<vmem>>) attributes {dimension_semantics = [#tpu.dimension_semantics<parallel>, #tpu.dimension_semantics<parallel>], iteration_bounds = array<i64: 2, 1>, scalar_prefetch = 0 : i64, scratch_operands = 0 : i64, tpu.core_type = #tpu.core_type<tc>, window_params = [{transform_indices = @transform_0, window_bounds = array<i64: 256, 256>}, {transform_indices = @transform_1, window_bounds = array<i64: 256, 128>}, {transform_indices = @transform_2, window_bounds = array<i64: 1, 128>}, {transform_indices = @transform_3, window_bounds = array<i64: 256, 128>}]} {
    %c0 = arith.constant 0 : index
    %c0_0 = arith.constant 0 : index
    %0 = vector.load %arg2[%c0, %c0_0] : memref<256x256xbf16, #tpu.memory_space<vmem>>, vector<256x256xbf16>
    %c0_1 = arith.constant 0 : index
    %c0_2 = arith.constant 0 : index
    %1 = vector.load %arg3[%c0_1, %c0_2] : memref<256x128xbf16, #tpu.memory_space<vmem>>, vector<256x128xbf16>
    %cst = arith.constant dense<0.000000e+00> : vector<256x128xf32>
    %2 = tpu.matmul %0, %1, %cst {dimension_numbers = #tpu.dot_dimension_numbers<[1], [0], [0], [1], [0, 0, 1, 1], [], []>} : vector<256x256xbf16>, vector<256x128xbf16>, vector<256x128xf32> -> vector<256x128xf32>
    %c0_3 = arith.constant 0 : index
    %c0_4 = arith.constant 0 : index
    %3 = vector.load %arg4[%c0_3, %c0_4] : memref<1x128xf32, #tpu.memory_space<vmem>>, vector<1x128xf32>
    %4 = vector.broadcast %3 : vector<1x128xf32> to vector<256x128xf32>
    %5 = arith.addf %2, %4 : vector<256x128xf32>
    %cst_5 = arith.constant 0.000000e+00 : f32
    %6 = vector.broadcast %cst_5 : f32 to vector<256x128xf32>
    %7 = arith.maximumf %5, %6 : vector<256x128xf32>
    %8 = arith.truncf %7 : vector<256x128xf32> to vector<256x128xbf16>
    %c0_6 = arith.constant 0 : index
    %c0_7 = arith.constant 0 : index
    %9 = vector.load %arg5[%c0_6, %c0_7] : memref<256x128xbf16, #tpu.memory_space<vmem>>, vector<256x128xbf16>
    tpu.vector_store %arg5[%c0_6, %c0_7], %8 {strides = array<i32>} : memref<256x128xbf16, #tpu.memory_space<vmem>>, vector<256x128xbf16>,
    return
  }
  func.func @transform_0(%arg0: i32, %arg1: i32) -> (i32, i32) {
    %c0_i32 = arith.constant 0 : i32
    %c0_i32_0 = arith.constant 0 : i32
    return %arg0, %c0_i32 : i32, i32
  }
  func.func @transform_1(%arg0: i32, %arg1: i32) -> (i32, i32) {
    %c0_i32 = arith.constant 0 : i32
    %c0_i32_0 = arith.constant 0 : i32
    return %c0_i32, %arg1 : i32, i32
  }
  func.func @transform_2(%arg0: i32, %arg1: i32) -> (i32, i32) {
    %c0_i32 = arith.constant 0 : i32
    %c0_i32_0 = arith.constant 0 : i32
    return %c0_i32, %arg1 : i32, i32
  }
  func.func @transform_3(%arg0: i32, %arg1: i32) -> (i32, i32) {
    %c0_i32 = arith.constant 0 : i32
    return %arg0, %arg1 : i32, i32
  }
}

</mosaic_0001>

<llo_original>
// kernel: tpu_custom_call.1
$region0: #{tpu_custom_call.1}
  #allocation0 [shape = 'u32[]', space=smem, size = 0x4, offset = 0x4, fixed_abs, tag = 'smem constant byte address 0x4 - core index']
  #allocation1 [shape = 'u32[72,128]{1,0:T(1,128)}', space=vmem, size = 0x9000, scoped, tag = 'internal scratch']
  %s0 = inlined_call_operand.hbm [shape: bf16[512,256], index: 0, kind: input, shape index: {}]
  %s1 = inlined_call_operand.hbm [shape: bf16[256,128], index: 1, kind: input, shape index: {}]
  %s2 = inlined_call_operand.vmem [shape: f32[1,128], index: 2, kind: input, shape index: {}]
  %s3 = inlined_call_operand.hbm [shape: bf16[512,128], index: 3, kind: output, shape index: {}]
  %s4 = sld [smem:[#allocation0]]
  $region53: #{tpu_custom_call.1} parent=0
    _
  %s6 = ssub.s32 1, %s4
  %s7 = scalar_select 0, %s6, %s4
  $region1: #{tpu_custom_call.1} parent=0
    #allocation2 [shape = 'u8[262144]{0}', space=vmem, size = 0x40000, scoped, tag = 'input window, operand 0']
    #allocation3 [shape = 's32[2]{0}', space=sflag, size = 0x8, scoped, tag = 'scoped memory for tpu_custom_call.1']
    #allocation4 [shape = 's32[2]{0}', space=sflag, size = 0x8, scoped, tag = 'scoped memory for tpu_custom_call.1']
    #allocation5 [shape = 'u8[65536]{0}', space=vmem, size = 0x10000, scoped, tag = 'input window, operand 1, single buffered']
    #allocation6 [shape = 's32[1]{0}', space=sflag, size = 0x4, scoped, tag = 'scoped memory for tpu_custom_call.1']
    #allocation7 [shape = 'u8[131072]{0}', space=vmem, size = 0x20000, scoped, tag = 'output window, operand 0']
    %8 = vsyncpa [#allocation3], 0
    %s9 = scalar_lea.sflag [#allocation3], 1
    %10 = vsyncpa %s9, 0
    %11 = vsyncpa [#allocation6], 0
    %12 = vsyncpa [#allocation4], 0
    %s13 = scalar_lea.sflag [#allocation4], 1
    %14 = vsyncpa %s13, 0
    loop: start=0, step=1, limit=4
    $region2: #{tpu_custom_call.1} parent=1 // loop_pre_header
      _
    $region3: #{tpu_custom_call.1} parent=1 // loop_header
      %s16 = sphi 0, %s20
      %p17 = scmp.ge.s32.totalorder %s16, 4
      %s23 = sphi 0, %s35
      %s24 = sphi 0, %s31
      %s25 = sphi 0, %s23
      %s26 = sphi 0, %s24
      %s27 = sphi 0, %s25
      %s28 = sphi 0, %s26
      %s38 = sphi 0, %s40
      %s41 = sphi 0, %s38
      %s42 = sphi 0, %s41
      %s58 = sphi 0, %s42
      %s64 = sphi 0, %s66
      %s67 = sphi 0, %s64
      %s68 = sphi 0, %s67
      %s84 = sphi 0, %s68
      %s90 = sphi 0, %s92
      %s93 = sphi 0, %s90
      %s94 = sphi 0, %s93
      %s110 = sphi 0, %s94
      %s118 = sphi 0, %s120
      %s121 = sphi 0, %s118
      %s122 = sphi 0, %s121
      %s138 = sphi 0, %s122
    $region4: #{tpu_custom_call.1} parent=1 // loop_header_branch
      %19 = sbr.rel (%p17) target = $region8
    $region5: #{tpu_custom_call.1} parent=1 // loop_body
      %s21 = ssub.s32 %s16, 1
      %s22 = ssub.s32 %s16, 2
      %s29 = sadd.s32 1, %s24
      %p30 = scmp.ge.s32.totalorder %s29, 1
      %s31 = scalar_select %p30, 0, %s29
      %s32 = sadd.s32 1, %s23
      %s33 = scalar_select %p30, %s32, %s23
      %p34 = scmp.ge.s32.totalorder %s33, 2
      %s35 = scalar_select %p34, 0, %s33
      %s36 = ssub.s32 %s23, %s35
      %p37 = scmp.eq.s32.totalorder %s36, 0
      %s39 = sadd.s32 %s38, 1
      %s40 = scalar_select %p37, %s38, %s39
      %p43 = pneg %p37
      %p44 = scmp.eq.s32.totalorder %s16, 1
      %p45 = por %p43, %p44
      %p46 = scmp.ne.s32.totalorder %s38, %s41
      %p47 = scmp.eq.s32.totalorder %s16, 0
      %p48 = por %p46, %p47
      %p49 = scmp.ne.s32.totalorder %s38, %s41
      %p50 = scmp.eq.s32.totalorder %s21, 1
      %p51 = por %p49, %p50
      %p52 = scmp.ne.s32.totalorder %s41, %s42
      %p53 = scmp.eq.s32.totalorder %s21, 0
      %p54 = por %p52, %p53
      %p55 = scmp.ne.s32.totalorder %s41, %s42
      %p56 = scmp.eq.s32.totalorder %s22, 1
      %p57 = por %p55, %p56
      %p59 = scmp.ne.s32.totalorder %s42, %s58
      %p60 = scmp.eq.s32.totalorder %s22, 0
      %p61 = por %p59, %p60
      %s62 = ssub.s32 %s24, %s31
      %p63 = scmp.eq.s32.totalorder %s62, 0
      %s65 = sadd.s32 %s64, 1
      %s66 = scalar_select %p63, %s64, %s65
      %p69 = pneg %p63
      %p70 = scmp.eq.s32.totalorder %s16, 1
      %p71 = por %p69, %p70
      %p72 = scmp.ne.s32.totalorder %s64, %s67
      %p73 = scmp.eq.s32.totalorder %s16, 0
      %p74 = por %p72, %p73
      %p75 = scmp.ne.s32.totalorder %s64, %s67
      %p76 = scmp.eq.s32.totalorder %s21, 1
      %p77 = por %p75, %p76
      %p78 = scmp.ne.s32.totalorder %s67, %s68
      %p79 = scmp.eq.s32.totalorder %s21, 0
      %p80 = por %p78, %p79
      %p81 = scmp.ne.s32.totalorder %s67, %s68
      %p82 = scmp.eq.s32.totalorder %s22, 1
      %p83 = por %p81, %p82
      %p85 = scmp.ne.s32.totalorder %s68, %s84
      %p86 = scmp.eq.s32.totalorder %s22, 0
      %p87 = por %p85, %p86
      %s88 = ssub.s32 %s24, %s31
      %p89 = scmp.eq.s32.totalorder %s88, 0
      %s91 = sadd.s32 %s90, 1
      %s92 = scalar_select %p89, %s90, %s91
      %p95 = pneg %p89
      %p96 = scmp.eq.s32.totalorder %s16, 1
      %p97 = por %p95, %p96
      %p98 = scmp.ne.s32.totalorder %s90, %s93
      %p99 = scmp.eq.s32.totalorder %s16, 0
      %p100 = por %p98, %p99
      %p101 = scmp.ne.s32.totalorder %s90, %s93
      %p102 = scmp.eq.s32.totalorder %s21, 1
      %p103 = por %p101, %p102
      %p104 = scmp.ne.s32.totalorder %s93, %s94
      %p105 = scmp.eq.s32.totalorder %s21, 0
      %p106 = por %p104, %p105
      %p107 = scmp.ne.s32.totalorder %s93, %s94
      %p108 = scmp.eq.s32.totalorder %s22, 1
      %p109 = por %p107, %p108
      %p111 = scmp.ne.s32.totalorder %s94, %s110
      %p112 = scmp.eq.s32.totalorder %s22, 0
      %p113 = por %p111, %p112
      %s114 = ssub.s32 %s23, %s35
      %s115 = ssub.s32 %s24, %s31
      %s116 = sor.u32 %s114, %s115
      %p117 = scmp.eq.s32.totalorder %s116, 0
      %s119 = sadd.s32 %s118, 1
      %s120 = scalar_select %p117, %s118, %s119
      %p123 = pneg %p117
      %p124 = scmp.eq.s32.totalorder %s16, 1
      %p125 = por %p123, %p124
      %p126 = scmp.ne.s32.totalorder %s118, %s121
      %p127 = scmp.eq.s32.totalorder %s16, 0
      %p128 = por %p126, %p127
      %p129 = scmp.ne.s32.totalorder %s118, %s121
      %p130 = scmp.eq.s32.totalorder %s21, 1
      %p131 = por %p129, %p130
      %p132 = scmp.ne.s32.totalorder %s121, %s122
      %p133 = scmp.eq.s32.totalorder %s21, 0
      %p134 = por %p132, %p133
      %p135 = scmp.ne.s32.totalorder %s121, %s122
      %p136 = scmp.eq.s32.totalorder %s22, 1
      %p137 = por %p135, %p136
      %p139 = scmp.ne.s32.totalorder %s122, %s138
      %p140 = scmp.eq.s32.totalorder %s22, 0
      %p141 = por %p139, %p140
      %p142 = scmp.le.s32.totalorder 1, %s16
      %p143 = scmp.lt.s32.totalorder %s16, 3
      %p144 = pnand %p142, %p143
      %p145 = pneg %p144
      // Predicated region
      $region9: #{tpu_custom_call.1} parent=5 // pred_check
        _
      $region10: #{tpu_custom_call.1} parent=5 // pred_check_branch
        %147 = sbr.rel (%p144) target = $region12
      $region11: #{tpu_custom_call.1} parent=5 // pred_region
        %s148 = ssub.s32 %s16, 1
        // Predicated region
        $region13: #{tpu_custom_call.1} parent=11 // pred_check
          %p149 = pneg %p80
        $region14: #{tpu_custom_call.1} parent=11 // pred_check_branch
          %151 = sbr.rel (%p149) target = $region16
        $region15: #{tpu_custom_call.1} parent=11 // pred_region
          %153 = vsyncadd [#allocation6], 0
          %s154 = smul.addr %s26, 4
          %s155 = scalar_lea.hbm %s1, %s154
          %s156 = sshll.u32 %s155, 4
          %s157 = int_to_ptr.hbm [resolvable:$true] %s156
          %s158 = sshll.u32 [#allocation5], 4
          %s159 = int_to_ptr.vmem [resolvable:$true] %s158
          %164 = dma.hbm_to_vmem [thread:$0]  %s157, 2048, %s159, [#allocation6], 64, 64, 4
        $region16: #{tpu_custom_call.1} parent=11 // pred_fallthru
          _
        // Predicated region
        $region17: #{tpu_custom_call.1} parent=11 // pred_check
          %p165 = pneg %p106
        $region18: #{tpu_custom_call.1} parent=11 // pred_check_branch
          %167 = sbr.rel (%p165) target = $region20
        $region19: #{tpu_custom_call.1} parent=11 // pred_region
          %p168 = scmp.lt.s32.totalorder %s26, 0
          %s169 = scalar_select %p168, %s26, 0
          %s170 = scalar_lea.vmem %s2, %s169
        $region20: #{tpu_custom_call.1} parent=11 // pred_fallthru
          _
      $region12: #{tpu_custom_call.1} parent=5 // pred_fallthru
        _
      %p171 = scmp.lt.s32.totalorder %s16, 2
      // Predicated region
      $region21: #{tpu_custom_call.1} parent=5 // pred_check
        %p172 = pneg %p171
      $region22: #{tpu_custom_call.1} parent=5 // pred_check_branch
        %174 = sbr.rel (%p172) target = $region24
      $region23: #{tpu_custom_call.1} parent=5 // pred_region
        // Predicated region
        $region25: #{tpu_custom_call.1} parent=23 // pred_check
          %p175 = pneg %p48
        $region26: #{tpu_custom_call.1} parent=23 // pred_check_branch
          %177 = sbr.rel (%p175) target = $region28
        $region27: #{tpu_custom_call.1} parent=23 // pred_region
          %s178 = sand.u32 %s38, 1
          %s179 = scalar_lea.sflag [#allocation3], %s178
          %s180 = sand.u32 %s38, 1
          %s181 = smul.addr %s180, 256
          %s182 = scalar_lea.vmem [#allocation2], %s181
          %s183 = smul.u32 32, %s23
          %185 = vsyncadd %s179, 0
          %s186 = smul.addr %s183, 2
          %s187 = smul.addr %s186, 4
          %s188 = scalar_lea.hbm %s0, %s187
          %s189 = sshll.u32 %s188, 4
          %s190 = int_to_ptr.hbm [resolvable:$true] %s189
          %s191 = sshll.u32 %s182, 4
          %s192 = int_to_ptr.vmem [resolvable:$true] %s191
          %197 = dma.hbm_to_vmem [thread:$0]  %s190, 4096, %s192, %s179, 128, 128, 8
        $region28: #{tpu_custom_call.1} parent=23 // pred_fallthru
          _
      $region24: #{tpu_custom_call.1} parent=5 // pred_fallthru
        _
      %p198 = scmp.le.s32.totalorder 1, %s16
      %p199 = scmp.lt.s32.totalorder %s16, 3
      %p200 = pnand %p198, %p199
      %p201 = pneg %p200
      // Predicated region
      $region29: #{tpu_custom_call.1} parent=5 // pred_check
        _
      $region30: #{tpu_custom_call.1} parent=5 // pred_check_branch
        %203 = sbr.rel (%p200) target = $region32
      $region31: #{tpu_custom_call.1} parent=5 // pred_region
        %s204 = ssub.s32 %s16, 1
        %s205 = sand.u32 %s41, 1
        %s206 = scalar_lea.sflag [#allocation3], %s205
        %s207 = sand.u32 %s41, 1
        %s208 = smul.addr %s207, 256
        %s209 = scalar_lea.vmem [#allocation2], %s208
        // Predicated region
        $region33: #{tpu_custom_call.1} parent=31 // pred_check
          %p210 = pneg %p54
        $region34: #{tpu_custom_call.1} parent=31 // pred_check_branch
          %212 = sbr.rel (%p210) target = $region36
        $region35: #{tpu_custom_call.1} parent=31 // pred_region
          %214 = dma.done %s206, 4096
        $region36: #{tpu_custom_call.1} parent=31 // pred_fallthru
          _
        // Predicated region
        $region37: #{tpu_custom_call.1} parent=31 // pred_check
          %p215 = pneg %p80
        $region38: #{tpu_custom_call.1} parent=31 // pred_check_branch
          %217 = sbr.rel (%p215) target = $region40
        $region39: #{tpu_custom_call.1} parent=31 // pred_region
          %219 = dma.done [#allocation6], 2048
        $region40: #{tpu_custom_call.1} parent=31 // pred_fallthru
          _
        %s220 = sand.u32 %s41, 1
        %s221 = scalar_lea.sflag [#allocation3], %s220
        %s222 = sand.u32 %s41, 1
        %s223 = smul.addr %s222, 256
        %s224 = scalar_lea.vmem [#allocation2], %s223
        %p225 = pneg %p54
        %p226 = pneg %p51
        %p227 = pneg %p80
        %p228 = pneg %p77
        %p229 = scmp.lt.s32.totalorder %s26, 0
        %s230 = scalar_select %p229, %s26, 0
        %s231 = scalar_lea.vmem %s2, %s230
        %p232 = pneg %p106
        %p233 = pneg %p103
        %p234 = pneg %p134
        %p235 = pneg %p131
        %s236 = sand.u32 %s121, 1
        %s237 = scalar_lea.sflag [#allocation4], %s236
        %s238 = sand.u32 %s121, 1
        %s239 = smul.addr %s238, 128
        %s240 = scalar_lea.vmem [#allocation7], %s239
        %s241 = smul.u32 32, %s25
        %p242 = scmp.lt.s32.totalorder %s26, 0
        %s243 = scalar_select %p242, %s26, 0
        %s244 = scalar_lea.vmem %s2, %s243
        %s245 = smul.u32 32, %s25
        %v246 = vld [vmem:[%s209] sm:$0xff]
        %v247 = vld [vmem:[%s209 + $0x8] sm:$0xff]
        %v248 = vld [vmem:[%s209 + $0x10] sm:$0xff]
        %v249 = vld [vmem:[%s209 + $0x18] sm:$0xff]
        %v250 = vld [vmem:[%s209 + $0x20] sm:$0xff]
        %v251 = vld [vmem:[%s209 + $0x28] sm:$0xff]
        %v252 = vld [vmem:[%s209 + $0x30] sm:$0xff]
        %v253 = vld [vmem:[%s209 + $0x38] sm:$0xff]
        %v254 = vld [vmem:[%s209 + $0x40] sm:$0xff]
        %v255 = vld [vmem:[%s209 + $0x48] sm:$0xff]
        %v256 = vld [vmem:[%s209 + $0x50] sm:$0xff]
        %v257 = vld [vmem:[%s209 + $0x58] sm:$0xff]
        %v258 = vld [vmem:[%s209 + $0x60] sm:$0xff]
        %v259 = vld [vmem:[%s209 + $0x68] sm:$0xff]
        %v260 = vld [vmem:[%s209 + $0x70] sm:$0xff]
        %v261 = vld [vmem:[%s209 + $0x78] sm:$0xff]
        %v262 = vld [vmem:[%s209 + $0x80] sm:$0xff]
        %v263 = vld [vmem:[%s209 + $0x88] sm:$0xff]
        %v264 = vld [vmem:[%s209 + $0x90] sm:$0xff]
        %v265 = vld [vmem:[%s209 + $0x98] sm:$0xff]
        %v266 = vld [vmem:[%s209 + $0xa0] sm:$0xff]
        %v267 = vld [vmem:[%s209 + $0xa8] sm:$0xff]
        %v268 = vld [vmem:[%s209 + $0xb0] sm:$0xff]
        %v269 = vld [vmem:[%s209 + $0xb8] sm:$0xff]
        %v270 = vld [vmem:[%s209 + $0xc0] sm:$0xff]
        %v271 = vld [vmem:[%s209 + $0xc8] sm:$0xff]
        %v272 = vld [vmem:[%s209 + $0xd0] sm:$0xff]
        %v273 = vld [vmem:[%s209 + $0xd8] sm:$0xff]
        %v274 = vld [vmem:[%s209 + $0xe0] sm:$0xff]
        %v275 = vld [vmem:[%s209 + $0xe8] sm:$0xff]
        %v276 = vld [vmem:[%s209 + $0xf0] sm:$0xff]
        %v277 = vld [vmem:[%s209 + $0xf8] sm:$0xff]
        %v278 = vld [vmem:[#allocation5] sm:$0xf]
        %v279 = vld [vmem:[#allocation5 + $0x4] sm:$0xf]
        %v280 = vld [vmem:[#allocation5 + $0x8] sm:$0xf]
        %v281 = vld [vmem:[#allocation5 + $0xc] sm:$0xf]
        %v282 = vld [vmem:[#allocation5 + $0x10] sm:$0xf]
        %v283 = vld [vmem:[#allocation5 + $0x14] sm:$0xf]
        %v284 = vld [vmem:[#allocation5 + $0x18] sm:$0xf]
        %v285 = vld [vmem:[#allocation5 + $0x1c] sm:$0xf]
        %v286 = vld [vmem:[#allocation5 + $0x20] sm:$0xf]
        %v287 = vld [vmem:[#allocation5 + $0x24] sm:$0xf]
        %v288 = vld [vmem:[#allocation5 + $0x28] sm:$0xf]
        %v289 = vld [vmem:[#allocation5 + $0x2c] sm:$0xf]
        %v290 = vld [vmem:[#allocation5 + $0x30] sm:$0xf]
        %v291 = vld [vmem:[#allocation5 + $0x34] sm:$0xf]
        %v292 = vld [vmem:[#allocation5 + $0x38] sm:$0xf]
        %v293 = vld [vmem:[#allocation5 + $0x3c] sm:$0xf]
        %v294 = vld [vmem:[#allocation5 + $0x40] sm:$0xf]
        %v295 = vld [vmem:[#allocation5 + $0x44] sm:$0xf]
        %v296 = vld [vmem:[#allocation5 + $0x48] sm:$0xf]
        %v297 = vld [vmem:[#allocation5 + $0x4c] sm:$0xf]
        %v298 = vld [vmem:[#allocation5 + $0x50] sm:$0xf]
        %v299 = vld [vmem:[#allocation5 + $0x54] sm:$0xf]
        %v300 = vld [vmem:[#allocation5 + $0x58] sm:$0xf]
        %v301 = vld [vmem:[#allocation5 + $0x5c] sm:$0xf]
        %v302 = vld [vmem:[#allocation5 + $0x60] sm:$0xf]
        %v303 = vld [vmem:[#allocation5 + $0x64] sm:$0xf]
        %v304 = vld [vmem:[#allocation5 + $0x68] sm:$0xf]
        %v305 = vld [vmem:[#allocation5 + $0x6c] sm:$0xf]
        %v306 = vld [vmem:[#allocation5 + $0x70] sm:$0xf]
        %v307 = vld [vmem:[#allocation5 + $0x74] sm:$0xf]
        %v308 = vld [vmem:[#allocation5 + $0x78] sm:$0xf]
        %v309 = vld [vmem:[#allocation5 + $0x7c] sm:$0xf]
        %v310 = vld [vmem:[%s244] sm:$0x1]
        %v312 = vperm.slane %v310, 0
        %v346 = vunpack.c.l.b16 %v246
        %v347 = vunpack.c.h.b16 %v246
        %v348 = vunpack.c.l.b16 %v247
        %v349 = vunpack.c.h.b16 %v247
        %v350 = vunpack.c.l.b16 %v248
        %v351 = vunpack.c.h.b16 %v248
        %v352 = vunpack.c.l.b16 %v249
        %v353 = vunpack.c.h.b16 %v249
        %v354 = vunpack.c.l.b16 %v250
        %v355 = vunpack.c.h.b16 %v250
        %v356 = vunpack.c.l.b16 %v251
        %v357 = vunpack.c.h.b16 %v251
        %v358 = vunpack.c.l.b16 %v252
        %v359 = vunpack.c.h.b16 %v252
        %v360 = vunpack.c.l.b16 %v253
        %v361 = vunpack.c.h.b16 %v253
        %v362 = vunpack.c.l.b16 %v254
        %v363 = vunpack.c.h.b16 %v254
        %v364 = vunpack.c.l.b16 %v255
        %v365 = vunpack.c.h.b16 %v255
        %v366 = vunpack.c.l.b16 %v256
        %v367 = vunpack.c.h.b16 %v256
        %v368 = vunpack.c.l.b16 %v257
        %v369 = vunpack.c.h.b16 %v257
        %v370 = vunpack.c.l.b16 %v258
        %v371 = vunpack.c.h.b16 %v258
        %v372 = vunpack.c.l.b16 %v259
        %v373 = vunpack.c.h.b16 %v259
        %v374 = vunpack.c.l.b16 %v260
        %v375 = vunpack.c.h.b16 %v260
        %v376 = vunpack.c.l.b16 %v261
        %v377 = vunpack.c.h.b16 %v261
        %v378 = vunpack.c.l.b16 %v262
        %v379 = vunpack.c.h.b16 %v262
        %v380 = vunpack.c.l.b16 %v263
        %v381 = vunpack.c.h.b16 %v263
        %v382 = vunpack.c.l.b16 %v264
        %v383 = vunpack.c.h.b16 %v264
        %v384 = vunpack.c.l.b16 %v265
        %v385 = vunpack.c.h.b16 %v265
        %v386 = vunpack.c.l.b16 %v266
        %v387 = vunpack.c.h.b16 %v266
        %v388 = vunpack.c.l.b16 %v267
        %v389 = vunpack.c.h.b16 %v267
        %v390 = vunpack.c.l.b16 %v268
        %v391 = vunpack.c.h.b16 %v268
        %v392 = vunpack.c.l.b16 %v269
        %v393 = vunpack.c.h.b16 %v269
        %v394 = vunpack.c.l.b16 %v270
        %v395 = vunpack.c.h.b16 %v270
        %v396 = vunpack.c.l.b16 %v271
        %v397 = vunpack.c.h.b16 %v271
        %v398 = vunpack.c.l.b16 %v272
        %v399 = vunpack.c.h.b16 %v272
        %v400 = vunpack.c.l.b16 %v273
        %v401 = vunpack.c.h.b16 %v273
        %v402 = vunpack.c.l.b16 %v274
        %v403 = vunpack.c.h.b16 %v274
        %v404 = vunpack.c.l.b16 %v275
        %v405 = vunpack.c.h.b16 %v275
        %v406 = vunpack.c.l.b16 %v276
        %v407 = vunpack.c.h.b16 %v276
        %v408 = vunpack.c.l.b16 %v277
        %v409 = vunpack.c.h.b16 %v277
        %v410 = vpack.c.b16 %v348, %v346
        %v411 = vpack.c.b16 %v349, %v347
        %v412 = vpack.c.b16 %v352, %v350
        %v413 = vpack.c.b16 %v353, %v351
        %v414 = vpack.c.b16 %v356, %v354
        %v415 = vpack.c.b16 %v357, %v355
        %v416 = vpack.c.b16 %v360, %v358
        %v417 = vpack.c.b16 %v361, %v359
        %v418 = vpack.c.b16 %v364, %v362
        %v419 = vpack.c.b16 %v365, %v363
        %v420 = vpack.c.b16 %v368, %v366
        %v421 = vpack.c.b16 %v369, %v367
        %v422 = vpack.c.b16 %v372, %v370
        %v423 = vpack.c.b16 %v373, %v371
        %v424 = vpack.c.b16 %v376, %v374
        %v425 = vpack.c.b16 %v377, %v375
        %v426 = vpack.c.b16 %v380, %v378
        %v427 = vpack.c.b16 %v381, %v379
        %v428 = vpack.c.b16 %v384, %v382
        %v429 = vpack.c.b16 %v385, %v383
        %v430 = vpack.c.b16 %v388, %v386
        %v431 = vpack.c.b16 %v389, %v387
        %v432 = vpack.c.b16 %v392, %v390
        %v433 = vpack.c.b16 %v393, %v391
        %v434 = vpack.c.b16 %v396, %v394
        %v435 = vpack.c.b16 %v397, %v395
        %v436 = vpack.c.b16 %v400, %v398
        %v437 = vpack.c.b16 %v401, %v399
        %v438 = vpack.c.b16 %v404, %v402
        %v439 = vpack.c.b16 %v405, %v403
        %v440 = vpack.c.b16 %v408, %v406
        %v441 = vpack.c.b16 %v409, %v407
        %v506 = vunpack.c.l.b16 %v278
        %v507 = vunpack.c.l.b16 %v279
        %v508 = vunpack.c.l.b16 %v280
        %v509 = vunpack.c.l.b16 %v281
        %v510 = vunpack.c.l.b16 %v282
        %v511 = vunpack.c.l.b16 %v283
        %v512 = vunpack.c.l.b16 %v284
        %v513 = vunpack.c.l.b16 %v285
        %v514 = vunpack.c.l.b16 %v286
        %v515 = vunpack.c.l.b16 %v287
        %v516 = vunpack.c.l.b16 %v288
        %v517 = vunpack.c.l.b16 %v289
        %v518 = vunpack.c.l.b16 %v290
        %v519 = vunpack.c.l.b16 %v291
        %v520 = vunpack.c.l.b16 %v292
        %v521 = vunpack.c.l.b16 %v293
        %v522 = vunpack.c.l.b16 %v294
        %v523 = vunpack.c.l.b16 %v295
        %v524 = vunpack.c.l.b16 %v296
        %v525 = vunpack.c.l.b16 %v297
        %v526 = vunpack.c.l.b16 %v298
        %v527 = vunpack.c.l.b16 %v299
        %v528 = vunpack.c.l.b16 %v300
        %v529 = vunpack.c.l.b16 %v301
        %v530 = vunpack.c.l.b16 %v302
        %v531 = vunpack.c.l.b16 %v303
        %v532 = vunpack.c.l.b16 %v304
        %v533 = vunpack.c.l.b16 %v305
        %v534 = vunpack.c.l.b16 %v306
        %v535 = vunpack.c.l.b16 %v307
        %v536 = vunpack.c.l.b16 %v308
        %v537 = vunpack.c.l.b16 %v309
        %v538 = vpack.c.b16 %v507, %v506
        %v539 = vpack.c.b16 %v509, %v508
        %v540 = vpack.c.b16 %v511, %v510
        %v541 = vpack.c.b16 %v513, %v512
        %v542 = vpack.c.b16 %v515, %v514
        %v543 = vpack.c.b16 %v517, %v516
        %v544 = vpack.c.b16 %v519, %v518
        %v545 = vpack.c.b16 %v521, %v520
        %v546 = vpack.c.b16 %v523, %v522
        %v547 = vpack.c.b16 %v525, %v524
        %v548 = vpack.c.b16 %v527, %v526
        %v549 = vpack.c.b16 %v529, %v528
        %v550 = vpack.c.b16 %v531, %v530
        %v551 = vpack.c.b16 %v533, %v532
        %v552 = vpack.c.b16 %v535, %v534
        %v553 = vpack.c.b16 %v537, %v536
        %570 = vmatpush.bf16.msra.mxu0 %v545
        %571 = vmatpush.bf16.msra.mxu0 %v544
        %572 = vmatpush.bf16.msra.mxu0 %v543
        %573 = vmatpush.bf16.msra.mxu0 %v542
        %574 = vmatpush.bf16.msra.mxu0 %v541
        %575 = vmatpush.bf16.msra.mxu0 %v540
        %576 = vmatpush.bf16.msra.mxu0 %v539
        %577 = vmatpush.bf16.msra.mxu0 %v538
        %578 = vmatmul.bf16.gmra.mxu0 %v410
        %v579 = vpop.f32.mrf.mxu0
        %v580 = vadd.f32 %v312, %v579
        %v581 = vpop.f32.mrf.mxu0
        %v582 = vadd.f32 %v312, %v581
        %583 = vmatmul.bf16.gmra.mxu0 %v412
        %v584 = vpop.f32.mrf.mxu0
        %v585 = vadd.f32 %v312, %v584
        %v586 = vpop.f32.mrf.mxu0
        %v587 = vadd.f32 %v312, %v586
        %588 = vmatmul.bf16.gmra.mxu0 %v414
        %v589 = vpop.f32.mrf.mxu0
        %v590 = vadd.f32 %v312, %v589
        %v591 = vpop.f32.mrf.mxu0
        %v592 = vadd.f32 %v312, %v591
        %593 = vmatmul.bf16.gmra.mxu0 %v416
        %v594 = vpop.f32.mrf.mxu0
        %v595 = vadd.f32 %v312, %v594
        %v596 = vpop.f32.mrf.mxu0
        %v597 = vadd.f32 %v312, %v596
        %598 = vmatmul.bf16.gmra.mxu0 %v418
        %v599 = vpop.f32.mrf.mxu0
        %v600 = vadd.f32 %v312, %v599
        %v601 = vpop.f32.mrf.mxu0
        %v602 = vadd.f32 %v312, %v601
        %603 = vmatmul.bf16.gmra.mxu0 %v420
        %v604 = vpop.f32.mrf.mxu0
        %v605 = vadd.f32 %v312, %v604
        %v606 = vpop.f32.mrf.mxu0
        %v607 = vadd.f32 %v312, %v606
        %608 = vmatmul.bf16.gmra.mxu0 %v422
        %v609 = vpop.f32.mrf.mxu0
        %v610 = vadd.f32 %v312, %v609
        %v611 = vpop.f32.mrf.mxu0
        %v612 = vadd.f32 %v312, %v611
        %613 = vmatmul.bf16.gmra.mxu0 %v424
        %v614 = vpop.f32.mrf.mxu0
        %v615 = vadd.f32 %v312, %v614
        %v616 = vpop.f32.mrf.mxu0
        %v617 = vadd.f32 %v312, %v616
        %618 = vmatmul.bf16.gmra.mxu0 %v426
        %v619 = vpop.f32.mrf.mxu0
        %v620 = vadd.f32 %v312, %v619
        %v621 = vpop.f32.mrf.mxu0
        %v622 = vadd.f32 %v312, %v621
        %623 = vmatmul.bf16.gmra.mxu0 %v428
        %v624 = vpop.f32.mrf.mxu0
        %v625 = vadd.f32 %v312, %v624
        %v626 = vpop.f32.mrf.mxu0
        %v627 = vadd.f32 %v312, %v626
        %628 = vmatmul.bf16.gmra.mxu0 %v430
        %v629 = vpop.f32.mrf.mxu0
        %v630 = vadd.f32 %v312, %v629
        %v631 = vpop.f32.mrf.mxu0
        %v632 = vadd.f32 %v312, %v631
        %633 = vmatmul.bf16.gmra.mxu0 %v432
        %v634 = vpop.f32.mrf.mxu0
        %v635 = vadd.f32 %v312, %v634
        %v636 = vpop.f32.mrf.mxu0
        %v637 = vadd.f32 %v312, %v636
        %638 = vmatmul.bf16.gmra.mxu0 %v434
        %v639 = vpop.f32.mrf.mxu0
        %v640 = vadd.f32 %v312, %v639
        %v641 = vpop.f32.mrf.mxu0
        %v642 = vadd.f32 %v312, %v641
        %643 = vmatmul.bf16.gmra.mxu0 %v436
        %v644 = vpop.f32.mrf.mxu0
        %v645 = vadd.f32 %v312, %v644
        %v646 = vpop.f32.mrf.mxu0
        %v647 = vadd.f32 %v312, %v646
        %648 = vmatmul.bf16.gmra.mxu0 %v438
        %v649 = vpop.f32.mrf.mxu0
        %v650 = vadd.f32 %v312, %v649
        %v651 = vpop.f32.mrf.mxu0
        %v652 = vadd.f32 %v312, %v651
        %653 = vmatmul.bf16.gmra.mxu0 %v440
        %v654 = vpop.f32.mrf.mxu0
        %v655 = vadd.f32 %v312, %v654
        %v656 = vpop.f32.mrf.mxu0
        %v657 = vadd.f32 %v312, %v656
        %658 = vdwg.mxu0
        %659 = vmatpush.bf16.msra.mxu0 %v553
        %660 = vmatpush.bf16.msra.mxu0 %v552
        %661 = vmatpush.bf16.msra.mxu0 %v551
        %662 = vmatpush.bf16.msra.mxu0 %v550
        %663 = vmatpush.bf16.msra.mxu0 %v549
        %664 = vmatpush.bf16.msra.mxu0 %v548
        %665 = vmatpush.bf16.msra.mxu0 %v547
        %666 = vmatpush.bf16.msra.mxu0 %v546
        %667 = vmatmul.bf16.gmra.mxu0 %v411
        %v668 = vpop.f32.mrf.mxu0
        %v669 = vadd.f32 %v580, %v668
        %v670 = vpop.f32.mrf.mxu0
        %v671 = vadd.f32 %v582, %v670
        %672 = vmatmul.bf16.gmra.mxu0 %v413
        %v673 = vpop.f32.mrf.mxu0
        %v674 = vadd.f32 %v585, %v673
        %v675 = vpop.f32.mrf.mxu0
        %v676 = vadd.f32 %v587, %v675
        %677 = vmatmul.bf16.gmra.mxu0 %v415
        %v678 = vpop.f32.mrf.mxu0
        %v679 = vadd.f32 %v590, %v678
        %v680 = vpop.f32.mrf.mxu0
        %v681 = vadd.f32 %v592, %v680
        %682 = vmatmul.bf16.gmra.mxu0 %v417
        %v683 = vpop.f32.mrf.mxu0
        %v684 = vadd.f32 %v595, %v683
        %v685 = vpop.f32.mrf.mxu0
        %v686 = vadd.f32 %v597, %v685
        %687 = vmatmul.bf16.gmra.mxu0 %v419
        %v688 = vpop.f32.mrf.mxu0
        %v689 = vadd.f32 %v600, %v688
        %v690 = vpop.f32.mrf.mxu0
        %v691 = vadd.f32 %v602, %v690
        %692 = vmatmul.bf16.gmra.mxu0 %v421
        %v693 = vpop.f32.mrf.mxu0
        %v694 = vadd.f32 %v605, %v693
        %v695 = vpop.f32.mrf.mxu0
        %v696 = vadd.f32 %v607, %v695
        %697 = vmatmul.bf16.gmra.mxu0 %v423
        %v698 = vpop.f32.mrf.mxu0
        %v699 = vadd.f32 %v610, %v698
        %v700 = vpop.f32.mrf.mxu0
        %v701 = vadd.f32 %v612, %v700
        %702 = vmatmul.bf16.gmra.mxu0 %v425
        %v703 = vpop.f32.mrf.mxu0
        %v704 = vadd.f32 %v615, %v703
        %v705 = vpop.f32.mrf.mxu0
        %v706 = vadd.f32 %v617, %v705
        %707 = vmatmul.bf16.gmra.mxu0 %v427
        %v708 = vpop.f32.mrf.mxu0
        %v709 = vadd.f32 %v620, %v708
        %v710 = vpop.f32.mrf.mxu0
        %v711 = vadd.f32 %v622, %v710
        %712 = vmatmul.bf16.gmra.mxu0 %v429
        %v713 = vpop.f32.mrf.mxu0
        %v714 = vadd.f32 %v625, %v713
        %v715 = vpop.f32.mrf.mxu0
        %v716 = vadd.f32 %v627, %v715
        %717 = vmatmul.bf16.gmra.mxu0 %v431
        %v718 = vpop.f32.mrf.mxu0
        %v719 = vadd.f32 %v630, %v718
        %v720 = vpop.f32.mrf.mxu0
        %v721 = vadd.f32 %v632, %v720
        %722 = vmatmul.bf16.gmra.mxu0 %v433
        %v723 = vpop.f32.mrf.mxu0
        %v724 = vadd.f32 %v635, %v723
        %v725 = vpop.f32.mrf.mxu0
        %v726 = vadd.f32 %v637, %v725
        %727 = vmatmul.bf16.gmra.mxu0 %v435
        %v728 = vpop.f32.mrf.mxu0
        %v729 = vadd.f32 %v640, %v728
        %v730 = vpop.f32.mrf.mxu0
        %v731 = vadd.f32 %v642, %v730
        %732 = vmatmul.bf16.gmra.mxu0 %v437
        %v733 = vpop.f32.mrf.mxu0
        %v734 = vadd.f32 %v645, %v733
        %v735 = vpop.f32.mrf.mxu0
        %v736 = vadd.f32 %v647, %v735
        %737 = vmatmul.bf16.gmra.mxu0 %v439
        %v738 = vpop.f32.mrf.mxu0
        %v739 = vadd.f32 %v650, %v738
        %v740 = vpop.f32.mrf.mxu0
        %v741 = vadd.f32 %v652, %v740
        %742 = vmatmul.bf16.gmra.mxu0 %v441
        %v743 = vpop.f32.mrf.mxu0
        %v744 = vadd.f32 %v655, %v743
        %v745 = vpop.f32.mrf.mxu0
        %v746 = vadd.f32 %v657, %v745
        %747 = vdwg.mxu0
        %v748 = vmax.f32 %v669, 0.0
        %v749 = vmax.f32 %v671, 0.0
        %v750 = vmax.f32 %v674, 0.0
        %v751 = vmax.f32 %v676, 0.0
        %v752 = vmax.f32 %v679, 0.0
        %v753 = vmax.f32 %v681, 0.0
        %v754 = vmax.f32 %v684, 0.0
        %v755 = vmax.f32 %v686, 0.0
        %v756 = vmax.f32 %v689, 0.0
        %v757 = vmax.f32 %v691, 0.0
        %v758 = vmax.f32 %v694, 0.0
        %v759 = vmax.f32 %v696, 0.0
        %v760 = vmax.f32 %v699, 0.0
        %v761 = vmax.f32 %v701, 0.0
        %v762 = vmax.f32 %v704, 0.0
        %v763 = vmax.f32 %v706, 0.0
        %v764 = vmax.f32 %v709, 0.0
        %v765 = vmax.f32 %v711, 0.0
        %v766 = vmax.f32 %v714, 0.0
        %v767 = vmax.f32 %v716, 0.0
        %v768 = vmax.f32 %v719, 0.0
        %v769 = vmax.f32 %v721, 0.0
        %v770 = vmax.f32 %v724, 0.0
        %v771 = vmax.f32 %v726, 0.0
        %v772 = vmax.f32 %v729, 0.0
        %v773 = vmax.f32 %v731, 0.0
        %v774 = vmax.f32 %v734, 0.0
        %v775 = vmax.f32 %v736, 0.0
        %v776 = vmax.f32 %v739, 0.0
        %v777 = vmax.f32 %v741, 0.0
        %v778 = vmax.f32 %v744, 0.0
        %v779 = vmax.f32 %v746, 0.0
        %v780 = vpack.c.bf16 %v748, %v748
        %v781 = vpack.c.bf16 %v749, %v749
        %v782 = vpack.c.bf16 %v750, %v750
        %v783 = vpack.c.bf16 %v751, %v751
        %v784 = vpack.c.bf16 %v752, %v752
        %v785 = vpack.c.bf16 %v753, %v753
        %v786 = vpack.c.bf16 %v754, %v754
        %v787 = vpack.c.bf16 %v755, %v755
        %v788 = vpack.c.bf16 %v756, %v756
        %v789 = vpack.c.bf16 %v757, %v757
        %v790 = vpack.c.bf16 %v758, %v758
        %v791 = vpack.c.bf16 %v759, %v759
        %v792 = vpack.c.bf16 %v760, %v760
        %v793 = vpack.c.bf16 %v761, %v761
        %v794 = vpack.c.bf16 %v762, %v762
        %v795 = vpack.c.bf16 %v763, %v763
        %v796 = vpack.c.bf16 %v764, %v764
        %v797 = vpack.c.bf16 %v765, %v765
        %v798 = vpack.c.bf16 %v766, %v766
        %v799 = vpack.c.bf16 %v767, %v767
        %v800 = vpack.c.bf16 %v768, %v768
        %v801 = vpack.c.bf16 %v769, %v769
        %v802 = vpack.c.bf16 %v770, %v770
        %v803 = vpack.c.bf16 %v771, %v771
        %v804 = vpack.c.bf16 %v772, %v772
        %v805 = vpack.c.bf16 %v773, %v773
        %v806 = vpack.c.bf16 %v774, %v774
        %v807 = vpack.c.bf16 %v775, %v775
        %v808 = vpack.c.bf16 %v776, %v776
        %v809 = vpack.c.bf16 %v777, %v777
        %v810 = vpack.c.bf16 %v778, %v778
        %v811 = vpack.c.bf16 %v779, %v779
        %812 = vst [vmem:[%s240] sm:$0xf] %v780
        %813 = vst [vmem:[%s240 + $0x4] sm:$0xf] %v781
        %814 = vst [vmem:[%s240 + $0x8] sm:$0xf] %v782
        %815 = vst [vmem:[%s240 + $0xc] sm:$0xf] %v783
        %816 = vst [vmem:[%s240 + $0x10] sm:$0xf] %v784
        %817 = vst [vmem:[%s240 + $0x14] sm:$0xf] %v785
        %818 = vst [vmem:[%s240 + $0x18] sm:$0xf] %v786
        %819 = vst [vmem:[%s240 + $0x1c] sm:$0xf] %v787
        %820 = vst [vmem:[%s240 + $0x20] sm:$0xf] %v788
        %821 = vst [vmem:[%s240 + $0x24] sm:$0xf] %v789
        %822 = vst [vmem:[%s240 + $0x28] sm:$0xf] %v790
        %823 = vst [vmem:[%s240 + $0x2c] sm:$0xf] %v791
        %824 = vst [vmem:[%s240 + $0x30] sm:$0xf] %v792
        %825 = vst [vmem:[%s240 + $0x34] sm:$0xf] %v793
        %826 = vst [vmem:[%s240 + $0x38] sm:$0xf] %v794
        %827 = vst [vmem:[%s240 + $0x3c] sm:$0xf] %v795
        %828 = vst [vmem:[%s240 + $0x40] sm:$0xf] %v796
        %829 = vst [vmem:[%s240 + $0x44] sm:$0xf] %v797
        %830 = vst [vmem:[%s240 + $0x48] sm:$0xf] %v798
        %831 = vst [vmem:[%s240 + $0x4c] sm:$0xf] %v799
        %832 = vst [vmem:[%s240 + $0x50] sm:$0xf] %v800
        %833 = vst [vmem:[%s240 + $0x54] sm:$0xf] %v801
        %834 = vst [vmem:[%s240 + $0x58] sm:$0xf] %v802
        %835 = vst [vmem:[%s240 + $0x5c] sm:$0xf] %v803
        %836 = vst [vmem:[%s240 + $0x60] sm:$0xf] %v804
        %837 = vst [vmem:[%s240 + $0x64] sm:$0xf] %v805
        %838 = vst [vmem:[%s240 + $0x68] sm:$0xf] %v806
        %839 = vst [vmem:[%s240 + $0x6c] sm:$0xf] %v807
        %840 = vst [vmem:[%s240 + $0x70] sm:$0xf] %v808
        %841 = vst [vmem:[%s240 + $0x74] sm:$0xf] %v809
        %842 = vst [vmem:[%s240 + $0x78] sm:$0xf] %v810
        %843 = vst [vmem:[%s240 + $0x7c] sm:$0xf] %v811
        %s844 = sand.u32 %s121, 1
        %s845 = scalar_lea.sflag [#allocation4], %s844
        %s846 = sand.u32 %s121, 1
        %s847 = smul.addr %s846, 128
        %s848 = scalar_lea.vmem [#allocation7], %s847
        // Predicated region
        $region41: #{tpu_custom_call.1} parent=31 // pred_check
          %p849 = pneg %p131
        $region42: #{tpu_custom_call.1} parent=31 // pred_check_branch
          %851 = sbr.rel (%p849) target = $region44
        $region43: #{tpu_custom_call.1} parent=31 // pred_region
          %s852 = smul.u32 32, %s25
          %854 = vsyncadd %s845, 0
          %s855 = sadd.s32 %s26, %s852
          %s856 = smul.addr %s855, 4
          %s857 = scalar_lea.hbm %s3, %s856
          %s858 = sshll.u32 %s848, 4
          %s859 = int_to_ptr.vmem [resolvable:$true] %s858
          %s860 = sshll.u32 %s857, 4
          %s861 = int_to_ptr.hbm [resolvable:$true] %s860
          %866 = dma.vmem_to_hbm [thread:$0]  %s859, 2048, %s861, %s845, 64, 64, 4
        $region44: #{tpu_custom_call.1} parent=31 // pred_fallthru
          _
      $region32: #{tpu_custom_call.1} parent=5 // pred_fallthru
        _
      %p867 = scmp.le.s32.totalorder 2, %s16
      // Predicated region
      $region45: #{tpu_custom_call.1} parent=5 // pred_check
        %p868 = pneg %p867
      $region46: #{tpu_custom_call.1} parent=5 // pred_check_branch
        %870 = sbr.rel (%p868) target = $region48
      $region47: #{tpu_custom_call.1} parent=5 // pred_region
        %s871 = ssub.s32 %s16, 2
        // Predicated region
        $region49: #{tpu_custom_call.1} parent=47 // pred_check
          %p872 = pneg %p137
        $region50: #{tpu_custom_call.1} parent=47 // pred_check_branch
          %874 = sbr.rel (%p872) target = $region52
        $region51: #{tpu_custom_call.1} parent=47 // pred_region
          %s875 = sand.u32 %s122, 1
          %s876 = scalar_lea.sflag [#allocation4], %s875
          %s877 = sand.u32 %s122, 1
          %s878 = smul.addr %s877, 128
          %s879 = scalar_lea.vmem [#allocation7], %s878
          %881 = dma.done %s876, 2048
        $region52: #{tpu_custom_call.1} parent=47 // pred_fallthru
          _
      $region48: #{tpu_custom_call.1} parent=5 // pred_fallthru
        _
    $region6: #{tpu_custom_call.1} parent=1 // loop_footer
      %s20 = sadd.s32 1, %s16
    $region7: #{tpu_custom_call.1} parent=1 // loop_footer_branch
      %15 = sbr.rel target = $region3
    $region8: #{tpu_custom_call.1} parent=1 // loop_exit
      _
    %882 = vsyncpa [#allocation3], 1
    %s883 = scalar_lea.sflag [#allocation3], 1
    %884 = vsyncpa %s883, 1
    %885 = vsyncpa [#allocation6], 1
    %886 = vsyncpa [#allocation4], 1
    %s887 = scalar_lea.sflag [#allocation4], 1
    %888 = vsyncpa %s887, 1

</llo_original>
